<compile_context>
chip_gen: v7x
topology: tpu7x:2x2x1
jax: 0.10.0
libtpu: 0.0.40
codegen_flags: <defaults>
</compile_context>

<pallas_src>
import functools

import jax
import jax.numpy as jnp
from jax.experimental import pallas as pl
from jax.experimental.pallas import tpu as pltpu


def _hypernet_kernel(x_ref, w1_ref, b1_ref, w2_ref, b2_ref, w3_ref, b3_ref, o_ref):
    # x_ref: (Cin, TM)   w: (Cout, Cin)   b: (Cout, 1)   o_ref: (Cout, TM)
    x = x_ref[...]                      # f32, (Cin, TM)
    cin = x.shape[0]

    # ---- Conv1 (1x1, K=Cin=4) on the VPU: Cin broadcast FMAs. --------------
    # w1[:, c] is lane-broadcast to TM lanes; x[c, :] is sublane-broadcast to
    # the 64 output channels.  Keeps the tiny-K matmul off the MXU.
    w1 = w1_ref[...]                    # (C, Cin) f32
    h = b1_ref[...] + w1[:, 0:1] * x[0:1, :]
    for c in range(1, cin):             # cin is static (=4): fully unrolled
        h = h + w1[:, c:c + 1] * x[c:c + 1, :]
    h = jnp.maximum(h, 0.0)             # ReLU in f32 (v5e VPU: no bf16 VALU)

    # ---- Conv2 (1x1, 64x64) on the MXU, bf16 operands / f32 accumulation. --
    h = jnp.dot(w2_ref[...].astype(jnp.bfloat16), h.astype(jnp.bfloat16),
                preferred_element_type=jnp.float32) + b2_ref[...]
    h = jnp.maximum(h, 0.0)

    # ---- Conv3 (1x1, 16x64) on the MXU + Softplus (beta=1, threshold=20). --
    h = jnp.dot(w3_ref[...].astype(jnp.bfloat16), h.astype(jnp.bfloat16),
                preferred_element_type=jnp.float32) + b3_ref[...]
    sp = jnp.where(h > 20.0, h, jnp.log1p(jnp.exp(jnp.minimum(h, 20.0))))

    o_ref[...] = sp.astype(o_ref.dtype)


@functools.partial(jax.jit, static_argnames=("tm",))
def hypernet_forward(x_nchw, params, *, tm=4096):
    """x_nchw: (N, Cin, H, W) float32. Returns (N, Cout, H, W) float32."""
    w1, b1, w2, b2, w3, b3 = params
    n, cin, hh, ww = x_nchw.shape
    cout = w3.shape[0]
    hw = hh * ww

    # NCHW -> (N, Cin, H*W): pure reshape, no transpose, no pad copy.
    x = x_nchw.reshape(n, cin, hw)

    # Effective pixel tile: full image if it fits, else a multiple of 128.
    if tm >= hw:
        tm_eff = hw
    else:
        tm_eff = max(128, (tm // 128) * 128)

    # v7x megacore: make sure both TensorCores get work when possible.
    if n * pl.cdiv(hw, tm_eff) < 2 and tm_eff % 256 == 0:
        tm_eff //= 2

    grid = (n, pl.cdiv(hw, tm_eff))

    out = pl.pallas_call(
        _hypernet_kernel,
        out_shape=jax.ShapeDtypeStruct((n, cout, hw), jnp.float32),
        grid_spec=pltpu.PrefetchScalarGridSpec(
            num_scalar_prefetch=0,
            grid=grid,
            in_specs=[
                # x tile: batch dim squeezed, pixels in the lane dim.
                pl.BlockSpec((None, cin, tm_eff), lambda b, i: (b, 0, i)),
                pl.BlockSpec(w1.shape, lambda b, i: (0, 0)),   # w1 (C, Cin)
                pl.BlockSpec(b1.shape, lambda b, i: (0, 0)),   # b1 (C, 1)
                pl.BlockSpec(w2.shape, lambda b, i: (0, 0)),   # w2 (C, C)
                pl.BlockSpec(b2.shape, lambda b, i: (0, 0)),   # b2 (C, 1)
                pl.BlockSpec(w3.shape, lambda b, i: (0, 0)),   # w3 (Cout, C)
                pl.BlockSpec(b3.shape, lambda b, i: (0, 0)),   # b3 (Cout, 1)
            ],
            out_specs=pl.BlockSpec((None, cout, tm_eff), lambda b, i: (b, 0, i)),
        ),
        compiler_params=pltpu.CompilerParams(
            dimension_semantics=("parallel", "parallel"),
        ),
    )(x, w1, b1, w2, b2, w3, b3)

    # (N, Cout, H*W) -> NCHW: pure reshape.
    return out.reshape(n, cout, hh, ww)


def init_params(key, in_nc=4, channel=64, out_nc=16):
    """Deterministic synthetic parameters (Kaiming-uniform-ish, PyTorch layout)."""
    k1, k2, k3, k4, k5, k6 = jax.random.split(key, 6)

    def uinit(k, shape, fan_in):
        bound = 1.0 / jnp.sqrt(fan_in)
        return jax.random.uniform(k, shape, jnp.float32, -bound, bound)

    # Weights stored as (Cout, Cin) like torch Conv2d(1x1); biases as (Cout, 1).
    w1 = uinit(k1, (channel, in_nc), in_nc)
    b1 = uinit(k2, (channel, 1), in_nc)
    w2 = uinit(k3, (channel, channel), channel)
    b2 = uinit(k4, (channel, 1), channel)
    w3 = uinit(k5, (out_nc, channel), channel)
    b3 = uinit(k6, (out_nc, 1), channel)
    return (w1, b1, w2, b2, w3, b3)


def _reference_forward(x_nchw, params):
    """Plain-JAX f32 reference for correctness checking."""
    w1, b1, w2, b2, w3, b3 = params
    n, cin, hh, ww = x_nchw.shape
    x = x_nchw.reshape(n, cin, hh * ww)
    h = jnp.maximum(jnp.einsum("oc,ncm->nom", w1, x) + b1[None], 0.0)
    h = jnp.maximum(jnp.einsum("oc,ncm->nom", w2, h) + b2[None], 0.0)
    h = jnp.einsum("oc,ncm->nom", w3, h) + b3[None]
    sp = jnp.where(h > 20.0, h, jnp.log1p(jnp.exp(jnp.minimum(h, 20.0))))
    return sp.reshape(n, -1, hh, ww)


if __name__ == "__main__":
    key = jax.random.PRNGKey(0)
    kx, kx2, kp = jax.random.split(key, 3)

    # bf16 matmul operands + f32 accumulation over K<=64 -> ~1e-2 relative.
    TOL = dict(atol=2e-2, rtol=2e-2)

    params = init_params(kp, in_nc=4, channel=64, out_nc=16)

    # Main check: HyperNet(in_nc=4, channel=64, out_nc=16), small spatial size.
    N, C_IN, H, W = 2, 4, 16, 16
    x = jax.random.normal(kx, (N, C_IN, H, W), dtype=jnp.float32)
    out = jax.block_until_ready(hypernet_forward(x, params))
    ref = _reference_forward(x, params)
    assert out.shape == (N, 16, H, W), out.shape
    assert jnp.allclose(out, ref, **TOL), float(jnp.max(jnp.abs(out - ref)))

    # Partial-tile check: H*W = 324 (not a multiple of 128) with tm=128 so the
    # last pixel block is partial and its stores must be clipped correctly.
    x2 = jax.random.normal(kx2, (1, C_IN, 18, 18), dtype=jnp.float32)
    out2 = jax.block_until_ready(hypernet_forward(x2, params, tm=128))
    ref2 = _reference_forward(x2, params)
    assert out2.shape == (1, 16, 18, 18), out2.shape
    assert jnp.allclose(out2, ref2, **TOL), float(jnp.max(jnp.abs(out2 - ref2)))

    print("KERNEL_OK")
</pallas_src>

<mosaic_0001>
module attributes {stable_mosaic.version = 11 : i64} {
  func.func @_hypernet_kernel(%arg0: i32, %arg1: i32, %arg2: memref<1x4x256xf32, #tpu.memory_space<vmem>>, %arg3: memref<64x4xf32, #tpu.memory_space<vmem>>, %arg4: memref<64x1xf32, #tpu.memory_space<vmem>>, %arg5: memref<64x64xf32, #tpu.memory_space<vmem>>, %arg6: memref<64x1xf32, #tpu.memory_space<vmem>>, %arg7: memref<16x64xf32, #tpu.memory_space<vmem>>, %arg8: memref<16x1xf32, #tpu.memory_space<vmem>>, %arg9: memref<1x16x256xf32, #tpu.memory_space<vmem>>) attributes {dimension_semantics = [#tpu.dimension_semantics<parallel>, #tpu.dimension_semantics<parallel>], iteration_bounds = array<i64: 2, 1>, scalar_prefetch = 0 : i64, scratch_operands = 0 : i64, tpu.core_type = #tpu.core_type<tc>, window_params = [{transform_indices = @transform_0, window_bounds = array<i64: 1, 4, 256>}, {pipeline_mode = #tpu.pipeline_mode<synchronous>, transform_indices = @transform_1, window_bounds = array<i64: 64, 4>}, {pipeline_mode = #tpu.pipeline_mode<synchronous>, transform_indices = @transform_2, window_bounds = array<i64: 64, 1>}, {pipeline_mode = #tpu.pipeline_mode<synchronous>, transform_indices = @transform_3, window_bounds = array<i64: 64, 64>}, {pipeline_mode = #tpu.pipeline_mode<synchronous>, transform_indices = @transform_4, window_bounds = array<i64: 64, 1>}, {pipeline_mode = #tpu.pipeline_mode<synchronous>, transform_indices = @transform_5, window_bounds = array<i64: 16, 64>}, {pipeline_mode = #tpu.pipeline_mode<synchronous>, transform_indices = @transform_6, window_bounds = array<i64: 16, 1>}, {transform_indices = @transform_7, window_bounds = array<i64: 1, 16, 256>}]} {
    %c0 = arith.constant 0 : index
    %c0_0 = arith.constant 0 : index
    %c0_1 = arith.constant 0 : index
    %0 = vector.load %arg2[%c0, %c0_0, %c0_1] : memref<1x4x256xf32, #tpu.memory_space<vmem>>, vector<1x4x256xf32>
    %1 = vector.shape_cast %0 : vector<1x4x256xf32> to vector<4x256xf32>
    %c0_2 = arith.constant 0 : index
    %c0_3 = arith.constant 0 : index
    %2 = vector.load %arg3[%c0_2, %c0_3] : memref<64x4xf32, #tpu.memory_space<vmem>>, vector<64x4xf32>
    %c0_4 = arith.constant 0 : index
    %c0_5 = arith.constant 0 : index
    %3 = vector.load %arg4[%c0_4, %c0_5] : memref<64x1xf32, #tpu.memory_space<vmem>>, vector<64x1xf32>
    %4 = vector.extract_strided_slice %2 {offsets = [0, 0], sizes = [64, 1], strides = [1, 1]} : vector<64x4xf32> to vector<64x1xf32>
    %5 = vector.extract_strided_slice %1 {offsets = [0, 0], sizes = [1, 256], strides = [1, 1]} : vector<4x256xf32> to vector<1x256xf32>
    %6 = vector.broadcast %4 : vector<64x1xf32> to vector<64x256xf32>
    %7 = vector.broadcast %5 : vector<1x256xf32> to vector<64x256xf32>
    %8 = arith.mulf %6, %7 : vector<64x256xf32>
    %9 = vector.broadcast %3 : vector<64x1xf32> to vector<64x256xf32>
    %10 = arith.addf %9, %8 : vector<64x256xf32>
    %11 = vector.extract_strided_slice %2 {offsets = [0, 1], sizes = [64, 1], strides = [1, 1]} : vector<64x4xf32> to vector<64x1xf32>
    %12 = vector.extract_strided_slice %1 {offsets = [1, 0], sizes = [1, 256], strides = [1, 1]} : vector<4x256xf32> to vector<1x256xf32>
    %13 = vector.broadcast %11 : vector<64x1xf32> to vector<64x256xf32>
    %14 = vector.broadcast %12 : vector<1x256xf32> to vector<64x256xf32>
    %15 = arith.mulf %13, %14 : vector<64x256xf32>
    %16 = arith.addf %10, %15 : vector<64x256xf32>
    %17 = vector.extract_strided_slice %2 {offsets = [0, 2], sizes = [64, 1], strides = [1, 1]} : vector<64x4xf32> to vector<64x1xf32>
    %18 = vector.extract_strided_slice %1 {offsets = [2, 0], sizes = [1, 256], strides = [1, 1]} : vector<4x256xf32> to vector<1x256xf32>
    %19 = vector.broadcast %17 : vector<64x1xf32> to vector<64x256xf32>
    %20 = vector.broadcast %18 : vector<1x256xf32> to vector<64x256xf32>
    %21 = arith.mulf %19, %20 : vector<64x256xf32>
    %22 = arith.addf %16, %21 : vector<64x256xf32>
    %23 = vector.extract_strided_slice %2 {offsets = [0, 3], sizes = [64, 1], strides = [1, 1]} : vector<64x4xf32> to vector<64x1xf32>
    %24 = vector.extract_strided_slice %1 {offsets = [3, 0], sizes = [1, 256], strides = [1, 1]} : vector<4x256xf32> to vector<1x256xf32>
    %25 = vector.broadcast %23 : vector<64x1xf32> to vector<64x256xf32>
    %26 = vector.broadcast %24 : vector<1x256xf32> to vector<64x256xf32>
    %27 = arith.mulf %25, %26 : vector<64x256xf32>
    %28 = arith.addf %22, %27 : vector<64x256xf32>
    %cst = arith.constant 0.000000e+00 : f32
    %29 = vector.broadcast %cst : f32 to vector<64x256xf32>
    %30 = arith.maximumf %28, %29 : vector<64x256xf32>
    %c0_6 = arith.constant 0 : index
    %c0_7 = arith.constant 0 : index
    %31 = vector.load %arg5[%c0_6, %c0_7] : memref<64x64xf32, #tpu.memory_space<vmem>>, vector<64x64xf32>
    %32 = arith.truncf %31 : vector<64x64xf32> to vector<64x64xbf16>
    %33 = arith.truncf %30 : vector<64x256xf32> to vector<64x256xbf16>
    %cst_8 = arith.constant dense<0.000000e+00> : vector<64x256xf32>
    %34 = tpu.matmul %32, %33, %cst_8 {dimension_numbers = #tpu.dot_dimension_numbers<[1], [0], [0], [1], [0, 0, 1, 1], [], []>} : vector<64x64xbf16>, vector<64x256xbf16>, vector<64x256xf32> -> vector<64x256xf32>
    %c0_9 = arith.constant 0 : index
    %c0_10 = arith.constant 0 : index
    %35 = vector.load %arg6[%c0_9, %c0_10] : memref<64x1xf32, #tpu.memory_space<vmem>>, vector<64x1xf32>
    %36 = vector.broadcast %35 : vector<64x1xf32> to vector<64x256xf32>
    %37 = arith.addf %34, %36 : vector<64x256xf32>
    %cst_11 = arith.constant 0.000000e+00 : f32
    %38 = vector.broadcast %cst_11 : f32 to vector<64x256xf32>
    %39 = arith.maximumf %37, %38 : vector<64x256xf32>
    %c0_12 = arith.constant 0 : index
    %c0_13 = arith.constant 0 : index
    %40 = vector.load %arg7[%c0_12, %c0_13] : memref<16x64xf32, #tpu.memory_space<vmem>>, vector<16x64xf32>
    %41 = arith.truncf %40 : vector<16x64xf32> to vector<16x64xbf16>
    %42 = arith.truncf %39 : vector<64x256xf32> to vector<64x256xbf16>
    %cst_14 = arith.constant dense<0.000000e+00> : vector<16x256xf32>
    %43 = tpu.matmul %41, %42, %cst_14 {dimension_numbers = #tpu.dot_dimension_numbers<[1], [0], [0], [1], [0, 0, 1, 1], [], []>} : vector<16x64xbf16>, vector<64x256xbf16>, vector<16x256xf32> -> vector<16x256xf32>
    %c0_15 = arith.constant 0 : index
    %c0_16 = arith.constant 0 : index
    %44 = vector.load %arg8[%c0_15, %c0_16] : memref<16x1xf32, #tpu.memory_space<vmem>>, vector<16x1xf32>
    %45 = vector.broadcast %44 : vector<16x1xf32> to vector<16x256xf32>
    %46 = arith.addf %43, %45 : vector<16x256xf32>
    %cst_17 = arith.constant 2.000000e+01 : f32
    %47 = vector.broadcast %cst_17 : f32 to vector<16x256xf32>
    %48 = arith.cmpf ogt, %46, %47 : vector<16x256xf32>
    %cst_18 = arith.constant 2.000000e+01 : f32
    %49 = vector.broadcast %cst_18 : f32 to vector<16x256xf32>
    %50 = arith.minimumf %46, %49 : vector<16x256xf32>
    %51 = math.exp %50 : vector<16x256xf32>
    %52 = math.log1p %51 : vector<16x256xf32>
    %53 = arith.select %48, %46, %52 : vector<16x256xi1>, vector<16x256xf32>
    %c0_19 = arith.constant 0 : index
    %c0_20 = arith.constant 0 : index
    %c0_21 = arith.constant 0 : index
    %54 = vector.load %arg9[%c0_19, %c0_20, %c0_21] : memref<1x16x256xf32, #tpu.memory_space<vmem>>, vector<1x16x256xf32>
    %55 = vector.shape_cast %54 : vector<1x16x256xf32> to vector<16x256xf32>
    %56 = vector.shape_cast %53 : vector<16x256xf32> to vector<1x16x256xf32>
    tpu.vector_store %arg9[%c0_19, %c0_20, %c0_21], %56 {strides = array<i32>} : memref<1x16x256xf32, #tpu.memory_space<vmem>>, vector<1x16x256xf32>,
    return
  }
  func.func @transform_0(%arg0: i32, %arg1: i32) -> (i32, i32, i32) {
    %c0_i32 = arith.constant 0 : i32
    %c0_i32_0 = arith.constant 0 : i32
    return %arg0, %c0_i32, %arg1 : i32, i32, i32
  }
  func.func @transform_1(%arg0: i32, %arg1: i32) -> (i32, i32) {
    %c0_i32 = arith.constant 0 : i32
    %c0_i32_0 = arith.constant 0 : i32
    %c0_i32_1 = arith.constant 0 : i32
    return %c0_i32, %c0_i32_0 : i32, i32
  }
  func.func @transform_2(%arg0: i32, %arg1: i32) -> (i32, i32) {
    %c0_i32 = arith.constant 0 : i32
    %c0_i32_0 = arith.constant 0 : i32
    %c0_i32_1 = arith.constant 0 : i32
    return %c0_i32, %c0_i32_0 : i32, i32
  }
  func.func @transform_3(%arg0: i32, %arg1: i32) -> (i32, i32) {
    %c0_i32 = arith.constant 0 : i32
    %c0_i32_0 = arith.constant 0 : i32
    %c0_i32_1 = arith.constant 0 : i32
    return %c0_i32, %c0_i32_0 : i32, i32
  }
  func.func @transform_4(%arg0: i32, %arg1: i32) -> (i32, i32) {
    %c0_i32 = arith.constant 0 : i32
    %c0_i32_0 = arith.constant 0 : i32
    %c0_i32_1 = arith.constant 0 : i32
    return %c0_i32, %c0_i32_0 : i32, i32
  }
  func.func @transform_5(%arg0: i32, %arg1: i32) -> (i32, i32) {
    %c0_i32 = arith.constant 0 : i32
    %c0_i32_0 = arith.constant 0 : i32
    %c0_i32_1 = arith.constant 0 : i32
    return %c0_i32, %c0_i32_0 : i32, i32
  }
  func.func @transform_6(%arg0: i32, %arg1: i32) -> (i32, i32) {
    %c0_i32 = arith.constant 0 : i32
    %c0_i32_0 = arith.constant 0 : i32
    %c0_i32_1 = arith.constant 0 : i32
    return %c0_i32, %c0_i32_0 : i32, i32
  }
  func.func @transform_7(%arg0: i32, %arg1: i32) -> (i32, i32, i32) {
    %c0_i32 = arith.constant 0 : i32
    %c0_i32_0 = arith.constant 0 : i32
    return %arg0, %c0_i32, %arg1 : i32, i32, i32
  }
}

</mosaic_0001>

<llo_original>
// kernel: hypernet_forward.1
$region0: #{hypernet_forward.1}
  #allocation0 [shape = 'u32[]', space=smem, size = 0x4, offset = 0x4, fixed_abs, tag = 'smem constant byte address 0x4 - core index']
  #allocation1 [shape = 'u32[144,128]{1,0:T(1,128)}', space=vmem, size = 0x12000, scoped, tag = 'internal scratch']
  %s0 = inlined_call_operand.vmem [shape: f32[2,4,256], index: 0, kind: input, shape index: {}]
  %s1 = inlined_call_operand.vmem [shape: f32[64,4], index: 1, kind: input, shape index: {}]
  %s2 = inlined_call_operand.vmem [shape: f32[64,1], index: 2, kind: input, shape index: {}]
  %s3 = inlined_call_operand.vmem [shape: f32[64,64], index: 3, kind: input, shape index: {}]
  %s4 = inlined_call_operand.vmem [shape: f32[64,1], index: 4, kind: input, shape index: {}]
  %s5 = inlined_call_operand.vmem [shape: f32[16,64], index: 5, kind: input, shape index: {}]
  %s6 = inlined_call_operand.vmem [shape: f32[16,1], index: 6, kind: input, shape index: {}]
  %s7 = inlined_call_operand.vmem [shape: f32[2,16,256], index: 7, kind: output, shape index: {}]
  %s8 = sld [smem:[#allocation0]]
  $region61: #{hypernet_forward.1} parent=0
    _
  %s10 = ssub.s32 1, %s8
  %s11 = scalar_select 0, %s10, %s8
  loop: start=0, step=1, limit=4
  $region2: #{hypernet_forward.1} parent=0 // loop_pre_header
    _
  $region3: #{hypernet_forward.1} parent=0 // loop_header
    %s13 = sphi 0, %s17
    %p14 = scmp.ge.s32.totalorder %s13, 4
    %s20 = sphi 0, %s32
    %s21 = sphi 0, %s28
    %s22 = sphi 0, %s20
    %s23 = sphi 0, %s21
    %s24 = sphi 0, %s22
    %s25 = sphi 0, %s23
    %s37 = sphi 0, %s39
    %s40 = sphi 0, %s37
    %s41 = sphi 0, %s40
    %s57 = sphi 0, %s41
    %s61 = sphi 0, %s61
    %s63 = sphi 0, %s61
    %s64 = sphi 0, %s63
    %s78 = sphi 0, %s64
    %s82 = sphi 0, %s82
    %s84 = sphi 0, %s82
    %s85 = sphi 0, %s84
    %s99 = sphi 0, %s85
    %s103 = sphi 0, %s103
    %s105 = sphi 0, %s103
    %s106 = sphi 0, %s105
    %s120 = sphi 0, %s106
    %s124 = sphi 0, %s124
    %s126 = sphi 0, %s124
    %s127 = sphi 0, %s126
    %s141 = sphi 0, %s127
    %s145 = sphi 0, %s145
    %s147 = sphi 0, %s145
    %s148 = sphi 0, %s147
    %s162 = sphi 0, %s148
    %s166 = sphi 0, %s166
    %s168 = sphi 0, %s166
    %s169 = sphi 0, %s168
    %s183 = sphi 0, %s169
    %s191 = sphi 0, %s193
    %s194 = sphi 0, %s191
    %s195 = sphi 0, %s194
    %s211 = sphi 0, %s195
  $region4: #{hypernet_forward.1} parent=0 // loop_header_branch
    %16 = sbr.rel (%p14) target = $region8
  $region5: #{hypernet_forward.1} parent=0 // loop_body
    %s18 = ssub.s32 %s13, 1
    %s19 = ssub.s32 %s13, 2
    %s26 = sadd.s32 1, %s21
    %p27 = scmp.ge.s32.totalorder %s26, 1
    %s28 = scalar_select %p27, 0, %s26
    %s29 = sadd.s32 1, %s20
    %s30 = scalar_select %p27, %s29, %s20
    %p31 = scmp.ge.s32.totalorder %s30, 2
    %s32 = scalar_select %p31, 0, %s30
    %s33 = ssub.s32 %s20, %s32
    %s34 = ssub.s32 %s21, %s28
    %s35 = sor.u32 %s33, %s34
    %p36 = scmp.eq.s32.totalorder %s35, 0
    %s38 = sadd.s32 %s37, 1
    %s39 = scalar_select %p36, %s37, %s38
    %p42 = pneg %p36
    %p43 = scmp.eq.s32.totalorder %s13, 1
    %p44 = por %p42, %p43
    %p45 = scmp.ne.s32.totalorder %s37, %s40
    %p46 = scmp.eq.s32.totalorder %s13, 0
    %p47 = por %p45, %p46
    %p48 = scmp.ne.s32.totalorder %s37, %s40
    %p49 = scmp.eq.s32.totalorder %s18, 1
    %p50 = por %p48, %p49
    %p51 = scmp.ne.s32.totalorder %s40, %s41
    %p52 = scmp.eq.s32.totalorder %s18, 0
    %p53 = por %p51, %p52
    %p54 = scmp.ne.s32.totalorder %s40, %s41
    %p55 = scmp.eq.s32.totalorder %s19, 1
    %p56 = por %p54, %p55
    %p58 = scmp.ne.s32.totalorder %s41, %s57
    %p59 = scmp.eq.s32.totalorder %s19, 0
    %p60 = por %p58, %p59
    %s62 = sadd.s32 %s61, 1
    %p65 = scmp.eq.s32.totalorder %s13, 1
    %p66 = scmp.ne.s32.totalorder %s61, %s63
    %p67 = scmp.eq.s32.totalorder %s13, 0
    %p68 = por %p66, %p67
    %p69 = scmp.ne.s32.totalorder %s61, %s63
    %p70 = scmp.eq.s32.totalorder %s18, 1
    %p71 = por %p69, %p70
    %p72 = scmp.ne.s32.totalorder %s63, %s64
    %p73 = scmp.eq.s32.totalorder %s18, 0
    %p74 = por %p72, %p73
    %p75 = scmp.ne.s32.totalorder %s63, %s64
    %p76 = scmp.eq.s32.totalorder %s19, 1
    %p77 = por %p75, %p76
    %p79 = scmp.ne.s32.totalorder %s64, %s78
    %p80 = scmp.eq.s32.totalorder %s19, 0
    %p81 = por %p79, %p80
    %s83 = sadd.s32 %s82, 1
    %p86 = scmp.eq.s32.totalorder %s13, 1
    %p87 = scmp.ne.s32.totalorder %s82, %s84
    %p88 = scmp.eq.s32.totalorder %s13, 0
    %p89 = por %p87, %p88
    %p90 = scmp.ne.s32.totalorder %s82, %s84
    %p91 = scmp.eq.s32.totalorder %s18, 1
    %p92 = por %p90, %p91
    %p93 = scmp.ne.s32.totalorder %s84, %s85
    %p94 = scmp.eq.s32.totalorder %s18, 0
    %p95 = por %p93, %p94
    %p96 = scmp.ne.s32.totalorder %s84, %s85
    %p97 = scmp.eq.s32.totalorder %s19, 1
    %p98 = por %p96, %p97
    %p100 = scmp.ne.s32.totalorder %s85, %s99
    %p101 = scmp.eq.s32.totalorder %s19, 0
    %p102 = por %p100, %p101
    %s104 = sadd.s32 %s103, 1
    %p107 = scmp.eq.s32.totalorder %s13, 1
    %p108 = scmp.ne.s32.totalorder %s103, %s105
    %p109 = scmp.eq.s32.totalorder %s13, 0
    %p110 = por %p108, %p109
    %p111 = scmp.ne.s32.totalorder %s103, %s105
    %p112 = scmp.eq.s32.totalorder %s18, 1
    %p113 = por %p111, %p112
    %p114 = scmp.ne.s32.totalorder %s105, %s106
    %p115 = scmp.eq.s32.totalorder %s18, 0
    %p116 = por %p114, %p115
    %p117 = scmp.ne.s32.totalorder %s105, %s106
    %p118 = scmp.eq.s32.totalorder %s19, 1
    %p119 = por %p117, %p118
    %p121 = scmp.ne.s32.totalorder %s106, %s120
    %p122 = scmp.eq.s32.totalorder %s19, 0
    %p123 = por %p121, %p122
    %s125 = sadd.s32 %s124, 1
    %p128 = scmp.eq.s32.totalorder %s13, 1
    %p129 = scmp.ne.s32.totalorder %s124, %s126
    %p130 = scmp.eq.s32.totalorder %s13, 0
    %p131 = por %p129, %p130
    %p132 = scmp.ne.s32.totalorder %s124, %s126
    %p133 = scmp.eq.s32.totalorder %s18, 1
    %p134 = por %p132, %p133
    %p135 = scmp.ne.s32.totalorder %s126, %s127
    %p136 = scmp.eq.s32.totalorder %s18, 0
    %p137 = por %p135, %p136
    %p138 = scmp.ne.s32.totalorder %s126, %s127
    %p139 = scmp.eq.s32.totalorder %s19, 1
    %p140 = por %p138, %p139
    %p142 = scmp.ne.s32.totalorder %s127, %s141
    %p143 = scmp.eq.s32.totalorder %s19, 0
    %p144 = por %p142, %p143
    %s146 = sadd.s32 %s145, 1
    %p149 = scmp.eq.s32.totalorder %s13, 1
    %p150 = scmp.ne.s32.totalorder %s145, %s147
    %p151 = scmp.eq.s32.totalorder %s13, 0
    %p152 = por %p150, %p151
    %p153 = scmp.ne.s32.totalorder %s145, %s147
    %p154 = scmp.eq.s32.totalorder %s18, 1
    %p155 = por %p153, %p154
    %p156 = scmp.ne.s32.totalorder %s147, %s148
    %p157 = scmp.eq.s32.totalorder %s18, 0
    %p158 = por %p156, %p157
    %p159 = scmp.ne.s32.totalorder %s147, %s148
    %p160 = scmp.eq.s32.totalorder %s19, 1
    %p161 = por %p159, %p160
    %p163 = scmp.ne.s32.totalorder %s148, %s162
    %p164 = scmp.eq.s32.totalorder %s19, 0
    %p165 = por %p163, %p164
    %s167 = sadd.s32 %s166, 1
    %p170 = scmp.eq.s32.totalorder %s13, 1
    %p171 = scmp.ne.s32.totalorder %s166, %s168
    %p172 = scmp.eq.s32.totalorder %s13, 0
    %p173 = por %p171, %p172
    %p174 = scmp.ne.s32.totalorder %s166, %s168
    %p175 = scmp.eq.s32.totalorder %s18, 1
    %p176 = por %p174, %p175
    %p177 = scmp.ne.s32.totalorder %s168, %s169
    %p178 = scmp.eq.s32.totalorder %s18, 0
    %p179 = por %p177, %p178
    %p180 = scmp.ne.s32.totalorder %s168, %s169
    %p181 = scmp.eq.s32.totalorder %s19, 1
    %p182 = por %p180, %p181
    %p184 = scmp.ne.s32.totalorder %s169, %s183
    %p185 = scmp.eq.s32.totalorder %s19, 0
    %p186 = por %p184, %p185
    %s187 = ssub.s32 %s20, %s32
    %s188 = ssub.s32 %s21, %s28
    %s189 = sor.u32 %s187, %s188
    %p190 = scmp.eq.s32.totalorder %s189, 0
    %s192 = sadd.s32 %s191, 1
    %s193 = scalar_select %p190, %s191, %s192
    %p196 = pneg %p190
    %p197 = scmp.eq.s32.totalorder %s13, 1
    %p198 = por %p196, %p197
    %p199 = scmp.ne.s32.totalorder %s191, %s194
    %p200 = scmp.eq.s32.totalorder %s13, 0
    %p201 = por %p199, %p200
    %p202 = scmp.ne.s32.totalorder %s191, %s194
    %p203 = scmp.eq.s32.totalorder %s18, 1
    %p204 = por %p202, %p203
    %p205 = scmp.ne.s32.totalorder %s194, %s195
    %p206 = scmp.eq.s32.totalorder %s18, 0
    %p207 = por %p205, %p206
    %p208 = scmp.ne.s32.totalorder %s194, %s195
    %p209 = scmp.eq.s32.totalorder %s19, 1
    %p210 = por %p208, %p209
    %p212 = scmp.ne.s32.totalorder %s195, %s211
    %p213 = scmp.eq.s32.totalorder %s19, 0
    %p214 = por %p212, %p213
    %p215 = scmp.le.s32.totalorder 1, %s13
    %p216 = scmp.lt.s32.totalorder %s13, 3
    %p217 = pnand %p215, %p216
    %p218 = pneg %p217
    // Predicated region
    $region9: #{hypernet_forward.1} parent=5 // pred_check
      _
    $region10: #{hypernet_forward.1} parent=5 // pred_check_branch
      %220 = sbr.rel (%p217) target = $region12
    $region11: #{hypernet_forward.1} parent=5 // pred_region
      %s221 = ssub.s32 %s13, 1
      // Predicated region
      $region13: #{hypernet_forward.1} parent=11 // pred_check
        %p222 = pneg %p74
      $region14: #{hypernet_forward.1} parent=11 // pred_check_branch
        %224 = sbr.rel (%p222) target = $region16
      $region15: #{hypernet_forward.1} parent=11 // pred_region
        _
      $region16: #{hypernet_forward.1} parent=11 // pred_fallthru
        _
      // Predicated region
      $region17: #{hypernet_forward.1} parent=11 // pred_check
        %p225 = pneg %p95
      $region18: #{hypernet_forward.1} parent=11 // pred_check_branch
        %227 = sbr.rel (%p225) target = $region20
      $region19: #{hypernet_forward.1} parent=11 // pred_region
        _
      $region20: #{hypernet_forward.1} parent=11 // pred_fallthru
        _
      // Predicated region
      $region21: #{hypernet_forward.1} parent=11 // pred_check
        %p228 = pneg %p116
      $region22: #{hypernet_forward.1} parent=11 // pred_check_branch
        %230 = sbr.rel (%p228) target = $region24
      $region23: #{hypernet_forward.1} parent=11 // pred_region
        _
      $region24: #{hypernet_forward.1} parent=11 // pred_fallthru
        _
      // Predicated region
      $region25: #{hypernet_forward.1} parent=11 // pred_check
        %p231 = pneg %p137
      $region26: #{hypernet_forward.1} parent=11 // pred_check_branch
        %233 = sbr.rel (%p231) target = $region28
      $region27: #{hypernet_forward.1} parent=11 // pred_region
        _
      $region28: #{hypernet_forward.1} parent=11 // pred_fallthru
        _
      // Predicated region
      $region29: #{hypernet_forward.1} parent=11 // pred_check
        %p234 = pneg %p158
      $region30: #{hypernet_forward.1} parent=11 // pred_check_branch
        %236 = sbr.rel (%p234) target = $region32
      $region31: #{hypernet_forward.1} parent=11 // pred_region
        _
      $region32: #{hypernet_forward.1} parent=11 // pred_fallthru
        _
      // Predicated region
      $region33: #{hypernet_forward.1} parent=11 // pred_check
        %p237 = pneg %p179
      $region34: #{hypernet_forward.1} parent=11 // pred_check_branch
        %239 = sbr.rel (%p237) target = $region36
      $region35: #{hypernet_forward.1} parent=11 // pred_region
        _
      $region36: #{hypernet_forward.1} parent=11 // pred_fallthru
        _
    $region12: #{hypernet_forward.1} parent=5 // pred_fallthru
      _
    %p240 = scmp.lt.s32.totalorder %s13, 2
    // Predicated region
    $region37: #{hypernet_forward.1} parent=5 // pred_check
      %p241 = pneg %p240
    $region38: #{hypernet_forward.1} parent=5 // pred_check_branch
      %243 = sbr.rel (%p241) target = $region40
    $region39: #{hypernet_forward.1} parent=5 // pred_region
      // Predicated region
      $region41: #{hypernet_forward.1} parent=39 // pred_check
        %p244 = pneg %p47
      $region42: #{hypernet_forward.1} parent=39 // pred_check_branch
        %246 = sbr.rel (%p244) target = $region44
      $region43: #{hypernet_forward.1} parent=39 // pred_region
        %s247 = smul.u32 2, %s21
        %p248 = scmp.lt.s32.totalorder %s20, 1
        %s249 = scalar_select %p248, %s20, 1
        %p250 = scmp.lt.s32.totalorder %s247, 1
        %s251 = scalar_select %p250, %s247, 1
        %s252 = smul.addr %s249, 2
        %s253 = sadd.s32 %s251, %s252
        %s254 = smul.addr %s253, 4
        %s255 = scalar_lea.vmem %s0, %s254
        %s256 = smul.u32 2, %s21
      $region44: #{hypernet_forward.1} parent=39 // pred_fallthru
        _
    $region40: #{hypernet_forward.1} parent=5 // pred_fallthru
      _
    %p257 = scmp.le.s32.totalorder 1, %s13
    %p258 = scmp.lt.s32.totalorder %s13, 3
    %p259 = pnand %p257, %p258
    %p260 = pneg %p259
    // Predicated region
    $region45: #{hypernet_forward.1} parent=5 // pred_check
      _
    $region46: #{hypernet_forward.1} parent=5 // pred_check_branch
      %262 = sbr.rel (%p259) target = $region48
    $region47: #{hypernet_forward.1} parent=5 // pred_region
      %s263 = ssub.s32 %s13, 1
      %s264 = smul.u32 2, %s23
      %p265 = scmp.lt.s32.totalorder %s22, 1
      %s266 = scalar_select %p265, %s22, 1
      %p267 = scmp.lt.s32.totalorder %s264, 1
      %s268 = scalar_select %p267, %s264, 1
      %s269 = smul.addr %s266, 2
      %s270 = sadd.s32 %s268, %s269
      %s271 = smul.addr %s270, 4
      %s272 = scalar_lea.vmem %s0, %s271
      %p273 = pneg %p53
      %p274 = pneg %p50
      %p275 = pneg %p74
      %p276 = pneg %p71
      %p277 = pneg %p95
      %p278 = pneg %p92
      %p279 = pneg %p116
      %p280 = pneg %p113
      %p281 = pneg %p137
      %p282 = pneg %p134
      %p283 = pneg %p158
      %p284 = pneg %p155
      %p285 = pneg %p179
      %p286 = pneg %p176
      %p287 = pneg %p207
      %p288 = pneg %p204
      %s289 = smul.u32 2, %s23
      %p290 = scmp.lt.s32.totalorder %s22, 1
      %s291 = scalar_select %p290, %s22, 1
      %p292 = scmp.lt.s32.totalorder %s289, 1
      %s293 = scalar_select %p292, %s289, 1
      %s294 = smul.addr %s291, 4
      %s295 = sadd.s32 %s293, %s294
      %s296 = smul.addr %s295, 8
      %s297 = scalar_lea.vmem %s7, %s296
      %s298 = smul.u32 2, %s23
      %p299 = scmp.lt.s32.totalorder %s22, 1
      %s300 = scalar_select %p299, %s22, 1
      %p301 = scmp.lt.s32.totalorder %s298, 1
      %s302 = scalar_select %p301, %s298, 1
      %s303 = smul.addr %s300, 2
      %s304 = sadd.s32 %s302, %s303
      %s305 = smul.addr %s304, 4
      %s306 = scalar_lea.vmem %s0, %s305
      %s307 = smul.u32 2, %s23
      %s308 = smul.u32 2, %s23
      %p309 = scmp.lt.s32.totalorder %s22, 1
      %s310 = scalar_select %p309, %s22, 1
      %p311 = scmp.lt.s32.totalorder %s308, 1
      %s312 = scalar_select %p311, %s308, 1
      %s313 = smul.addr %s310, 4
      %s314 = sadd.s32 %s312, %s313
      %s315 = smul.addr %s314, 8
      %s316 = scalar_lea.vmem %s7, %s315
      %s317 = smul.u32 2, %s23
      %v319 = vld [vmem:[%s306] sm:$0xff]
      %v320 = vld [vmem:[%s1] sm:$0xff]
      %v321 = vld [vmem:[%s1 + $0x8] sm:$0xff]
      %v322 = vld [vmem:[%s1 + $0x10] sm:$0xff]
      %v323 = vld [vmem:[%s1 + $0x18] sm:$0xff]
      %v324 = vld [vmem:[%s1 + $0x20] sm:$0xff]
      %v325 = vld [vmem:[%s1 + $0x28] sm:$0xff]
      %v326 = vld [vmem:[%s1 + $0x30] sm:$0xff]
      %v327 = vld [vmem:[%s1 + $0x38] sm:$0xff]
      %v328 = vld [vmem:[%s2] sm:$0xff]
      %v329 = vld [vmem:[%s2 + $0x8] sm:$0xff]
      %v330 = vld [vmem:[%s2 + $0x10] sm:$0xff]
      %v331 = vld [vmem:[%s2 + $0x18] sm:$0xff]
      %v332 = vld [vmem:[%s2 + $0x20] sm:$0xff]
      %v333 = vld [vmem:[%s2 + $0x28] sm:$0xff]
      %v334 = vld [vmem:[%s2 + $0x30] sm:$0xff]
      %v335 = vld [vmem:[%s2 + $0x38] sm:$0xff]
      %337 = vset.pattern.permute.xlu0 0
      %338 = vperm.xlu0 %337, %v320
      %v339 = vpop.permute.xlu0 %338
      %342 = vset.pattern.permute.xlu0 0
      %343 = vperm.xlu0 %342, %v321
      %v344 = vpop.permute.xlu0 %343
      %347 = vset.pattern.permute.xlu0 0
      %348 = vperm.xlu0 %347, %v322
      %v349 = vpop.permute.xlu0 %348
      %352 = vset.pattern.permute.xlu0 0
      %353 = vperm.xlu0 %352, %v323
      %v354 = vpop.permute.xlu0 %353
      %357 = vset.pattern.permute.xlu0 0
      %358 = vperm.xlu0 %357, %v324
      %v359 = vpop.permute.xlu0 %358
      %362 = vset.pattern.permute.xlu0 0
      %363 = vperm.xlu0 %362, %v325
      %v364 = vpop.permute.xlu0 %363
      %367 = vset.pattern.permute.xlu0 0
      %368 = vperm.xlu0 %367, %v326
      %v369 = vpop.permute.xlu0 %368
      %372 = vset.pattern.permute.xlu0 0
      %373 = vperm.xlu0 %372, %v327
      %v374 = vpop.permute.xlu0 %373
      %v377 = vlaneseq
      %v378 = vshrl.u32 %v377, 7
      %v379 = vsub.s32 0, %v378
      %v380 = vrot.slane %v319, %v379
      %v381 = vlaneseq
      %v382 = vshrl.u32 %v381, 7
      %v383 = vsub.s32 4, %v382
      %v384 = vrot.slane %v319, %v383
      %v387 = vlaneseq
      %v388 = vshrl.u32 %v387, 7
      %v389 = vsub.s32 0, %v388
      %v390 = vrot.slane %v380, %v389
      %v391 = vlaneseq
      %v392 = vshrl.u32 %v391, 7
      %v393 = vsub.s32 0, %v392
      %v394 = vrot.slane %v384, %v393
      %v395 = vmul.f32 %v339, %v390
      %v396 = vmul.f32 %v339, %v394
      %v397 = vmul.f32 %v344, %v390
      %v398 = vmul.f32 %v344, %v394
      %v399 = vmul.f32 %v349, %v390
      %v400 = vmul.f32 %v349, %v394
      %v401 = vmul.f32 %v354, %v390
      %v402 = vmul.f32 %v354, %v394
      %v403 = vmul.f32 %v359, %v390
      %v404 = vmul.f32 %v359, %v394
      %v405 = vmul.f32 %v364, %v390
      %v406 = vmul.f32 %v364, %v394
      %v407 = vmul.f32 %v369, %v390
      %v408 = vmul.f32 %v369, %v394
      %v409 = vmul.f32 %v374, %v390
      %v410 = vmul.f32 %v374, %v394
      %412 = vset.pattern.permute.xlu0 0
      %413 = vperm.xlu0 %412, %v328
      %v414 = vpop.permute.xlu0 %413
      %417 = vset.pattern.permute.xlu0 0
      %418 = vperm.xlu0 %417, %v329
      %v419 = vpop.permute.xlu0 %418
      %422 = vset.pattern.permute.xlu0 0
      %423 = vperm.xlu0 %422, %v330
      %v424 = vpop.permute.xlu0 %423
      %427 = vset.pattern.permute.xlu0 0
      %428 = vperm.xlu0 %427, %v331
      %v429 = vpop.permute.xlu0 %428
      %432 = vset.pattern.permute.xlu0 0
      %433 = vperm.xlu0 %432, %v332
      %v434 = vpop.permute.xlu0 %433
      %437 = vset.pattern.permute.xlu0 0
      %438 = vperm.xlu0 %437, %v333
      %v439 = vpop.permute.xlu0 %438
      %442 = vset.pattern.permute.xlu0 0
      %443 = vperm.xlu0 %442, %v334
      %v444 = vpop.permute.xlu0 %443
      %447 = vset.pattern.permute.xlu0 0
      %448 = vperm.xlu0 %447, %v335
      %v449 = vpop.permute.xlu0 %448
      %v451 = vadd.f32 %v414, %v395
      %v452 = vadd.f32 %v414, %v396
      %v453 = vadd.f32 %v419, %v397
      %v454 = vadd.f32 %v419, %v398
      %v455 = vadd.f32 %v424, %v399
      %v456 = vadd.f32 %v424, %v400
      %v457 = vadd.f32 %v429, %v401
      %v458 = vadd.f32 %v429, %v402
      %v459 = vadd.f32 %v434, %v403
      %v460 = vadd.f32 %v434, %v404
      %v461 = vadd.f32 %v439, %v405
      %v462 = vadd.f32 %v439, %v406
      %v463 = vadd.f32 %v444, %v407
      %v464 = vadd.f32 %v444, %v408
      %v465 = vadd.f32 %v449, %v409
      %v466 = vadd.f32 %v449, %v410
      %467 = vset.pattern.permute.xlu0 1
      %468 = vperm.xlu0 %467, %v320
      %v469 = vpop.permute.xlu0 %468
      %471 = vset.pattern.permute.xlu0 1
      %472 = vperm.xlu0 %471, %v321
      %v473 = vpop.permute.xlu0 %472
      %475 = vset.pattern.permute.xlu0 1
      %476 = vperm.xlu0 %475, %v322
      %v477 = vpop.permute.xlu0 %476
      %479 = vset.pattern.permute.xlu0 1
      %480 = vperm.xlu0 %479, %v323
      %v481 = vpop.permute.xlu0 %480
      %483 = vset.pattern.permute.xlu0 1
      %484 = vperm.xlu0 %483, %v324
      %v485 = vpop.permute.xlu0 %484
      %487 = vset.pattern.permute.xlu0 1
      %488 = vperm.xlu0 %487, %v325
      %v489 = vpop.permute.xlu0 %488
      %491 = vset.pattern.permute.xlu0 1
      %492 = vperm.xlu0 %491, %v326
      %v493 = vpop.permute.xlu0 %492
      %495 = vset.pattern.permute.xlu0 1
      %496 = vperm.xlu0 %495, %v327
      %v497 = vpop.permute.xlu0 %496
      %v499 = vlaneseq
      %v500 = vshrl.u32 %v499, 7
      %v501 = vsub.s32 1, %v500
      %v502 = vrot.slane %v319, %v501
      %v503 = vlaneseq
      %v504 = vshrl.u32 %v503, 7
      %v505 = vsub.s32 5, %v504
      %v506 = vrot.slane %v319, %v505
      %v509 = vlaneseq
      %v510 = vshrl.u32 %v509, 7
      %v511 = vsub.s32 1, %v510
      %v512 = vrot.slane %v502, %v511
      %v513 = vlaneseq
      %v514 = vshrl.u32 %v513, 7
      %v515 = vsub.s32 1, %v514
      %v516 = vrot.slane %v506, %v515
      %v517 = vmul.f32 %v469, %v512
      %v518 = vmul.f32 %v469, %v516
      %v519 = vmul.f32 %v473, %v512
      %v520 = vmul.f32 %v473, %v516
      %v521 = vmul.f32 %v477, %v512
      %v522 = vmul.f32 %v477, %v516
      %v523 = vmul.f32 %v481, %v512
      %v524 = vmul.f32 %v481, %v516
      %v525 = vmul.f32 %v485, %v512
      %v526 = vmul.f32 %v485, %v516
      %v527 = vmul.f32 %v489, %v512
      %v528 = vmul.f32 %v489, %v516
      %v529 = vmul.f32 %v493, %v512
      %v530 = vmul.f32 %v493, %v516
      %v531 = vmul.f32 %v497, %v512
      %v532 = vmul.f32 %v497, %v516
      %v533 = vadd.f32 %v451, %v517
      %v534 = vadd.f32 %v452, %v518
      %v535 = vadd.f32 %v453, %v519
      %v536 = vadd.f32 %v454, %v520
      %v537 = vadd.f32 %v455, %v521
      %v538 = vadd.f32 %v456, %v522
      %v539 = vadd.f32 %v457, %v523
      %v540 = vadd.f32 %v458, %v524
      %v541 = vadd.f32 %v459, %v525
      %v542 = vadd.f32 %v460, %v526
      %v543 = vadd.f32 %v461, %v527
      %v544 = vadd.f32 %v462, %v528
      %v545 = vadd.f32 %v463, %v529
      %v546 = vadd.f32 %v464, %v530
      %v547 = vadd.f32 %v465, %v531
      %v548 = vadd.f32 %v466, %v532
      %549 = vset.pattern.permute.xlu0 2
      %550 = vperm.xlu0 %549, %v320
      %v551 = vpop.permute.xlu0 %550
      %553 = vset.pattern.permute.xlu0 2
      %554 = vperm.xlu0 %553, %v321
      %v555 = vpop.permute.xlu0 %554
      %557 = vset.pattern.permute.xlu0 2
      %558 = vperm.xlu0 %557, %v322
      %v559 = vpop.permute.xlu0 %558
      %561 = vset.pattern.permute.xlu0 2
      %562 = vperm.xlu0 %561, %v323
      %v563 = vpop.permute.xlu0 %562
      %565 = vset.pattern.permute.xlu0 2
      %566 = vperm.xlu0 %565, %v324
      %v567 = vpop.permute.xlu0 %566
      %569 = vset.pattern.permute.xlu0 2
      %570 = vperm.xlu0 %569, %v325
      %v571 = vpop.permute.xlu0 %570
      %573 = vset.pattern.permute.xlu0 2
      %574 = vperm.xlu0 %573, %v326
      %v575 = vpop.permute.xlu0 %574
      %577 = vset.pattern.permute.xlu0 2
      %578 = vperm.xlu0 %577, %v327
      %v579 = vpop.permute.xlu0 %578
      %v581 = vlaneseq
      %v582 = vshrl.u32 %v581, 7
      %v583 = vsub.s32 2, %v582
      %v584 = vrot.slane %v319, %v583
      %v585 = vlaneseq
      %v586 = vshrl.u32 %v585, 7
      %v587 = vsub.s32 6, %v586
      %v588 = vrot.slane %v319, %v587
      %v591 = vlaneseq
      %v592 = vshrl.u32 %v591, 7
      %v593 = vsub.s32 2, %v592
      %v594 = vrot.slane %v584, %v593
      %v595 = vlaneseq
      %v596 = vshrl.u32 %v595, 7
      %v597 = vsub.s32 2, %v596
      %v598 = vrot.slane %v588, %v597
      %v599 = vmul.f32 %v551, %v594
      %v600 = vmul.f32 %v551, %v598
      %v601 = vmul.f32 %v555, %v594
      %v602 = vmul.f32 %v555, %v598
      %v603 = vmul.f32 %v559, %v594
      %v604 = vmul.f32 %v559, %v598
      %v605 = vmul.f32 %v563, %v594
      %v606 = vmul.f32 %v563, %v598
      %v607 = vmul.f32 %v567, %v594
      %v608 = vmul.f32 %v567, %v598
      %v609 = vmul.f32 %v571, %v594
      %v610 = vmul.f32 %v571, %v598
      %v611 = vmul.f32 %v575, %v594
      %v612 = vmul.f32 %v575, %v598
      %v613 = vmul.f32 %v579, %v594
      %v614 = vmul.f32 %v579, %v598
      %v615 = vadd.f32 %v533, %v599
      %v616 = vadd.f32 %v534, %v600
      %v617 = vadd.f32 %v535, %v601
      %v618 = vadd.f32 %v536, %v602
      %v619 = vadd.f32 %v537, %v603
      %v620 = vadd.f32 %v538, %v604
      %v621 = vadd.f32 %v539, %v605
      %v622 = vadd.f32 %v540, %v606
      %v623 = vadd.f32 %v541, %v607
      %v624 = vadd.f32 %v542, %v608
      %v625 = vadd.f32 %v543, %v609
      %v626 = vadd.f32 %v544, %v610
      %v627 = vadd.f32 %v545, %v611
      %v628 = vadd.f32 %v546, %v612
      %v629 = vadd.f32 %v547, %v613
      %v630 = vadd.f32 %v548, %v614
      %631 = vset.pattern.permute.xlu0 3
      %632 = vperm.xlu0 %631, %v320
      %v633 = vpop.permute.xlu0 %632
      %635 = vset.pattern.permute.xlu0 3
      %636 = vperm.xlu0 %635, %v321
      %v637 = vpop.permute.xlu0 %636
      %639 = vset.pattern.permute.xlu0 3
      %640 = vperm.xlu0 %639, %v322
      %v641 = vpop.permute.xlu0 %640
      %643 = vset.pattern.permute.xlu0 3
      %644 = vperm.xlu0 %643, %v323
      %v645 = vpop.permute.xlu0 %644
      %647 = vset.pattern.permute.xlu0 3
      %648 = vperm.xlu0 %647, %v324
      %v649 = vpop.permute.xlu0 %648
      %651 = vset.pattern.permute.xlu0 3
      %652 = vperm.xlu0 %651, %v325
      %v653 = vpop.permute.xlu0 %652
      %655 = vset.pattern.permute.xlu0 3
      %656 = vperm.xlu0 %655, %v326
      %v657 = vpop.permute.xlu0 %656
      %659 = vset.pattern.permute.xlu0 3
      %660 = vperm.xlu0 %659, %v327
      %v661 = vpop.permute.xlu0 %660
      %v663 = vlaneseq
      %v664 = vshrl.u32 %v663, 7
      %v665 = vsub.s32 3, %v664
      %v666 = vrot.slane %v319, %v665
      %v667 = vlaneseq
      %v668 = vshrl.u32 %v667, 7
      %v669 = vsub.s32 7, %v668
      %v670 = vrot.slane %v319, %v669
      %v673 = vlaneseq
      %v674 = vshrl.u32 %v673, 7
      %v675 = vsub.s32 3, %v674
      %v676 = vrot.slane %v666, %v675
      %v677 = vlaneseq
      %v678 = vshrl.u32 %v677, 7
      %v679 = vsub.s32 3, %v678
      %v680 = vrot.slane %v670, %v679
      %v681 = vmul.f32 %v633, %v676
      %v682 = vmul.f32 %v633, %v680
      %v683 = vmul.f32 %v637, %v676
      %v684 = vmul.f32 %v637, %v680
      %v685 = vmul.f32 %v641, %v676
      %v686 = vmul.f32 %v641, %v680
      %v687 = vmul.f32 %v645, %v676
      %v688 = vmul.f32 %v645, %v680
      %v689 = vmul.f32 %v649, %v676
      %v690 = vmul.f32 %v649, %v680
      %v691 = vmul.f32 %v653, %v676
      %v692 = vmul.f32 %v653, %v680
      %v693 = vmul.f32 %v657, %v676
      %v694 = vmul.f32 %v657, %v680
      %v695 = vmul.f32 %v661, %v676
      %v696 = vmul.f32 %v661, %v680
      %v697 = vadd.f32 %v615, %v681
      %v698 = vadd.f32 %v616, %v682
      %v699 = vadd.f32 %v617, %v683
      %v700 = vadd.f32 %v618, %v684
      %v701 = vadd.f32 %v619, %v685
      %v702 = vadd.f32 %v620, %v686
      %v703 = vadd.f32 %v621, %v687
      %v704 = vadd.f32 %v622, %v688
      %v705 = vadd.f32 %v623, %v689
      %v706 = vadd.f32 %v624, %v690
      %v707 = vadd.f32 %v625, %v691
      %v708 = vadd.f32 %v626, %v692
      %v709 = vadd.f32 %v627, %v693
      %v710 = vadd.f32 %v628, %v694
      %v711 = vadd.f32 %v629, %v695
      %v712 = vadd.f32 %v630, %v696
      %v713 = vmax.f32 %v697, 0.0
      %v714 = vmax.f32 %v698, 0.0
      %v715 = vmax.f32 %v699, 0.0
      %v716 = vmax.f32 %v700, 0.0
      %v717 = vmax.f32 %v701, 0.0
      %v718 = vmax.f32 %v702, 0.0
      %v719 = vmax.f32 %v703, 0.0
      %v720 = vmax.f32 %v704, 0.0
      %v721 = vmax.f32 %v705, 0.0
      %v722 = vmax.f32 %v706, 0.0
      %v723 = vmax.f32 %v707, 0.0
      %v724 = vmax.f32 %v708, 0.0
      %v725 = vmax.f32 %v709, 0.0
      %v726 = vmax.f32 %v710, 0.0
      %v727 = vmax.f32 %v711, 0.0
      %v728 = vmax.f32 %v712, 0.0
      %v729 = vld [vmem:[%s3] sm:$0xff]
      %v730 = vld [vmem:[%s3 + $0x8] sm:$0xff]
      %v731 = vld [vmem:[%s3 + $0x10] sm:$0xff]
      %v732 = vld [vmem:[%s3 + $0x18] sm:$0xff]
      %v733 = vld [vmem:[%s3 + $0x20] sm:$0xff]
      %v734 = vld [vmem:[%s3 + $0x28] sm:$0xff]
      %v735 = vld [vmem:[%s3 + $0x30] sm:$0xff]
      %v736 = vld [vmem:[%s3 + $0x38] sm:$0xff]
      %v737 = vpack.c.bf16 %v730, %v729
      %v738 = vpack.c.bf16 %v732, %v731
      %v739 = vpack.c.bf16 %v734, %v733
      %v740 = vpack.c.bf16 %v736, %v735
      %v741 = vpack.c.bf16 %v715, %v713
      %v742 = vpack.c.bf16 %v716, %v714
      %v743 = vpack.c.bf16 %v719, %v717
      %v744 = vpack.c.bf16 %v720, %v718
      %v745 = vpack.c.bf16 %v723, %v721
      %v746 = vpack.c.bf16 %v724, %v722
      %v747 = vpack.c.bf16 %v727, %v725
      %v748 = vpack.c.bf16 %v728, %v726
      %v749 = vld [vmem:[%s4] sm:$0xff]
      %v750 = vld [vmem:[%s4 + $0x8] sm:$0xff]
      %v751 = vld [vmem:[%s4 + $0x10] sm:$0xff]
      %v752 = vld [vmem:[%s4 + $0x18] sm:$0xff]
      %v753 = vld [vmem:[%s4 + $0x20] sm:$0xff]
      %v754 = vld [vmem:[%s4 + $0x28] sm:$0xff]
      %v755 = vld [vmem:[%s4 + $0x30] sm:$0xff]
      %v756 = vld [vmem:[%s4 + $0x38] sm:$0xff]
      %758 = vset.pattern.permute.xlu0 0
      %759 = vperm.xlu0 %758, %v749
      %v760 = vpop.permute.xlu0 %759
      %763 = vset.pattern.permute.xlu0 0
      %764 = vperm.xlu0 %763, %v750
      %v765 = vpop.permute.xlu0 %764
      %768 = vset.pattern.permute.xlu0 0
      %769 = vperm.xlu0 %768, %v751
      %v770 = vpop.permute.xlu0 %769
      %773 = vset.pattern.permute.xlu0 0
      %774 = vperm.xlu0 %773, %v752
      %v775 = vpop.permute.xlu0 %774
      %778 = vset.pattern.permute.xlu0 0
      %779 = vperm.xlu0 %778, %v753
      %v780 = vpop.permute.xlu0 %779
      %783 = vset.pattern.permute.xlu0 0
      %784 = vperm.xlu0 %783, %v754
      %v785 = vpop.permute.xlu0 %784
      %788 = vset.pattern.permute.xlu0 0
      %789 = vperm.xlu0 %788, %v755
      %v790 = vpop.permute.xlu0 %789
      %793 = vset.pattern.permute.xlu0 0
      %794 = vperm.xlu0 %793, %v756
      %v795 = vpop.permute.xlu0 %794
      %vm797 = vcmask 523264
      %v799 = vsel %vm797, %v737, 0
      %v802 = vsel %vm797, %v738, 0
      %v805 = vsel %vm797, %v739, 0
      %v808 = vsel %vm797, %v740, 0
      %810 = vmatprep.subr.bf16.mxu0 %v742
      %811 = vmatpush1.bf16.msra.mxu0 %v741
      %812 = vmatprep.subr.bf16.mxu0 %v744
      %813 = vmatpush1.bf16.msra.mxu0 %v743
      %814 = vmatprep.subr.bf16.mxu0 %v746
      %815 = vmatpush1.bf16.msra.mxu0 %v745
      %816 = vmatprep.subr.bf16.mxu0 %v748
      %817 = vmatpush1.bf16.msra.mxu0 %v747
      %818 = vmatprep.subr.bf16.mxu0 0
      %819 = vmatpush1.bf16.msra.mxu0 0
      %820 = vmatprep.subr.bf16.mxu0 0
      %821 = vmatpush1.bf16.msra.mxu0 0
      %822 = vmatprep.subr.bf16.mxu0 0
      %823 = vmatpush1.bf16.msra.mxu0 0
      %824 = vmatprep.subr.bf16.mxu0 0
      %825 = vmatpush1.bf16.msra.mxu0 0
      %826 = vmatprep.subr.bf16.mxu0 0
      %827 = vmatpush1.bf16.msra.mxu0 0
      %828 = vmatprep.subr.bf16.mxu0 0
      %829 = vmatpush1.bf16.msra.mxu0 0
      %830 = vmatprep.subr.bf16.mxu0 0
      %831 = vmatpush1.bf16.msra.mxu0 0
      %832 = vmatprep.subr.bf16.mxu0 0
      %833 = vmatpush1.bf16.msra.mxu0 0
      %834 = vmatprep.subr.bf16.mxu0 0
      %835 = vmatpush1.bf16.msra.mxu0 0
      %836 = vmatprep.subr.bf16.mxu0 0
      %837 = vmatpush1.bf16.msra.mxu0 0
      %838 = vmatprep.subr.bf16.mxu0 0
      %839 = vmatpush1.bf16.msra.mxu0 0
      %840 = vmatprep.subr.bf16.mxu0 0
      %841 = vmatpush1.bf16.msra.mxu0 0
      %842 = vmatprep.mubr.bf16.mxu0 0
      %843 = vmatmul.mubr.bf16.gmra.mrb[0].mxu0 %v799
      %v844 = vpop.f32.mrb[0].mxu0
      %v845 = vadd.f32 %v760, %v844
      %v846 = vpop.f32.mrb[0].mxu0
      %v847 = vadd.f32 %v760, %v846
      %v848 = vpop.f32.mrb[0].mxu0
      %v849 = vadd.f32 %v765, %v848
      %v850 = vpop.f32.mrb[0].mxu0
      %v851 = vadd.f32 %v765, %v850
      %852 = vmatprep.mubr.bf16.mxu0 0
      %853 = vmatmul.mubr.bf16.gmra.mrb[0].mxu0 %v802
      %v854 = vpop.f32.mrb[0].mxu0
      %v855 = vadd.f32 %v770, %v854
      %v856 = vpop.f32.mrb[0].mxu0
      %v857 = vadd.f32 %v770, %v856
      %v858 = vpop.f32.mrb[0].mxu0
      %v859 = vadd.f32 %v775, %v858
      %v860 = vpop.f32.mrb[0].mxu0
      %v861 = vadd.f32 %v775, %v860
      %862 = vmatprep.mubr.bf16.mxu0 0
      %863 = vmatmul.mubr.bf16.gmra.mrb[0].mxu0 %v805
      %v864 = vpop.f32.mrb[0].mxu0
      %v865 = vadd.f32 %v780, %v864
      %v866 = vpop.f32.mrb[0].mxu0
      %v867 = vadd.f32 %v780, %v866
      %v868 = vpop.f32.mrb[0].mxu0
      %v869 = vadd.f32 %v785, %v868
      %v870 = vpop.f32.mrb[0].mxu0
      %v871 = vadd.f32 %v785, %v870
      %872 = vmatprep.mubr.bf16.mxu0 0
      %873 = vmatmul.mubr.bf16.gmra.mrb[0].mxu0 %v808
      %v874 = vpop.f32.mrb[0].mxu0
      %v875 = vadd.f32 %v790, %v874
      %v876 = vpop.f32.mrb[0].mxu0
      %v877 = vadd.f32 %v790, %v876
      %v878 = vpop.f32.mrb[0].mxu0
      %v879 = vadd.f32 %v795, %v878
      %v880 = vpop.f32.mrb[0].mxu0
      %v881 = vadd.f32 %v795, %v880
      %882 = vdwg.mxu0
      %v883 = vmax.f32 %v845, 0.0
      %v884 = vmax.f32 %v847, 0.0
      %v885 = vmax.f32 %v849, 0.0
      %v886 = vmax.f32 %v851, 0.0
      %v887 = vmax.f32 %v855, 0.0
      %v888 = vmax.f32 %v857, 0.0
      %v889 = vmax.f32 %v859, 0.0
      %v890 = vmax.f32 %v861, 0.0
      %v891 = vmax.f32 %v865, 0.0
      %v892 = vmax.f32 %v867, 0.0
      %v893 = vmax.f32 %v869, 0.0
      %v894 = vmax.f32 %v871, 0.0
      %v895 = vmax.f32 %v875, 0.0
      %v896 = vmax.f32 %v877, 0.0
      %v897 = vmax.f32 %v879, 0.0
      %v898 = vmax.f32 %v881, 0.0
      %v899 = vld [vmem:[%s5] sm:$0xff]
      %v900 = vld [vmem:[%s5 + $0x8] sm:$0xff]
      %v901 = vpack.c.bf16 %v900, %v899
      %v902 = vpack.c.bf16 %v885, %v883
      %v903 = vpack.c.bf16 %v886, %v884
      %v904 = vpack.c.bf16 %v889, %v887
      %v905 = vpack.c.bf16 %v890, %v888
      %v906 = vpack.c.bf16 %v893, %v891
      %v907 = vpack.c.bf16 %v894, %v892
      %v908 = vpack.c.bf16 %v897, %v895
      %v909 = vpack.c.bf16 %v898, %v896
      %v910 = vld [vmem:[%s6] sm:$0xff]
      %v911 = vld [vmem:[%s6 + $0x8] sm:$0xff]
      %913 = vset.pattern.permute.xlu0 0
      %914 = vperm.xlu0 %913, %v910
      %v915 = vpop.permute.xlu0 %914
      %918 = vset.pattern.permute.xlu0 0
      %919 = vperm.xlu0 %918, %v911
      %v920 = vpop.permute.xlu0 %919
      %v923 = vsel %vm797, %v901, 0
      %925 = vmatprep.subr.bf16.mxu0 %v903
      %926 = vmatpush1.bf16.msra.mxu0 %v902
      %927 = vmatprep.subr.bf16.mxu0 %v905
      %928 = vmatpush1.bf16.msra.mxu0 %v904
      %929 = vmatprep.subr.bf16.mxu0 %v907
      %930 = vmatpush1.bf16.msra.mxu0 %v906
      %931 = vmatprep.subr.bf16.mxu0 %v909
      %932 = vmatpush1.bf16.msra.mxu0 %v908
      %933 = vmatprep.subr.bf16.mxu0 0
      %934 = vmatpush1.bf16.msra.mxu0 0
      %935 = vmatprep.subr.bf16.mxu0 0
      %936 = vmatpush1.bf16.msra.mxu0 0
      %937 = vmatprep.subr.bf16.mxu0 0
      %938 = vmatpush1.bf16.msra.mxu0 0
      %939 = vmatprep.subr.bf16.mxu0 0
      %940 = vmatpush1.bf16.msra.mxu0 0
      %941 = vmatprep.subr.bf16.mxu0 0
      %942 = vmatpush1.bf16.msra.mxu0 0
      %943 = vmatprep.subr.bf16.mxu0 0
      %944 = vmatpush1.bf16.msra.mxu0 0
      %945 = vmatprep.subr.bf16.mxu0 0
      %946 = vmatpush1.bf16.msra.mxu0 0
      %947 = vmatprep.subr.bf16.mxu0 0
      %948 = vmatpush1.bf16.msra.mxu0 0
      %949 = vmatprep.subr.bf16.mxu0 0
      %950 = vmatpush1.bf16.msra.mxu0 0
      %951 = vmatprep.subr.bf16.mxu0 0
      %952 = vmatpush1.bf16.msra.mxu0 0
      %953 = vmatprep.subr.bf16.mxu0 0
      %954 = vmatpush1.bf16.msra.mxu0 0
      %955 = vmatprep.subr.bf16.mxu0 0
      %956 = vmatpush1.bf16.msra.mxu0 0
      %957 = vmatprep.mubr.bf16.mxu0 0
      %958 = vmatmul.mubr.bf16.gmra.mrb[0].mxu0 %v923
      %v959 = vpop.f32.mrb[0].mxu0
      %v960 = vadd.f32 %v915, %v959
      %v961 = vpop.f32.mrb[0].mxu0
      %v962 = vadd.f32 %v915, %v961
      %v963 = vpop.f32.mrb[0].mxu0
      %v964 = vadd.f32 %v920, %v963
      %v965 = vpop.f32.mrb[0].mxu0
      %v966 = vadd.f32 %v920, %v965
      %967 = vdwg.mxu0
      %vm968 = vcmp.gt.f32.partialorder %v960, 20.0
      %vm969 = vcmp.gt.f32.partialorder %v962, 20.0
      %vm970 = vcmp.gt.f32.partialorder %v964, 20.0
      %vm971 = vcmp.gt.f32.partialorder %v966, 20.0
      %v972 = vmin.f32 %v960, 20.0
      %v973 = vmin.f32 %v962, 20.0
      %v974 = vmin.f32 %v964, 20.0
      %v975 = vmin.f32 %v966, 20.0
      %v976 = vmul.f32 %v972, 1.442695
      %v977 = vpow.pop %v976
      %v978 = vmul.f32 %v973, 1.442695
      %v979 = vpow.pop %v978
      %v980 = vmul.f32 %v974, 1.442695
      %v981 = vpow.pop %v980
      %v982 = vmul.f32 %v975, 1.442695
      %v983 = vpow.pop %v982
      %v984 = vadd.f32 %v977, 1.0
      %v985 = vlog2.pop %v984
      %v986 = vmul.f32 %v985, 0.6931472
      %v987 = vmul.f32 -0.5, %v977
      %v988 = vadd.f32 %v987, 1.0
      %v989 = vmul.f32 %v988, %v977
      %v990 = vand.u32 2147483647, %v977
      %vm991 = vcmp.lt.f32.partialorder %v990, 0.0004427343
      %v992 = vsel %vm991, %v989, %v986
      %v993 = vadd.f32 %v979, 1.0
      %v994 = vlog2.pop %v993
      %v995 = vmul.f32 %v994, 0.6931472
      %v996 = vmul.f32 -0.5, %v979
      %v997 = vadd.f32 %v996, 1.0
      %v998 = vmul.f32 %v997, %v979
      %v999 = vand.u32 2147483647, %v979
      %vm1000 = vcmp.lt.f32.partialorder %v999, 0.0004427343
      %v1001 = vsel %vm1000, %v998, %v995
      %v1002 = vadd.f32 %v981, 1.0
      %v1003 = vlog2.pop %v1002
      %v1004 = vmul.f32 %v1003, 0.6931472
      %v1005 = vmul.f32 -0.5, %v981
      %v1006 = vadd.f32 %v1005, 1.0
      %v1007 = vmul.f32 %v1006, %v981
      %v1008 = vand.u32 2147483647, %v981
      %vm1009 = vcmp.lt.f32.partialorder %v1008, 0.0004427343
      %v1010 = vsel %vm1009, %v1007, %v1004
      %v1011 = vadd.f32 %v983, 1.0
      %v1012 = vlog2.pop %v1011
      %v1013 = vmul.f32 %v1012, 0.6931472
      %v1014 = vmul.f32 -0.5, %v983
      %v1015 = vadd.f32 %v1014, 1.0
      %v1016 = vmul.f32 %v1015, %v983
      %v1017 = vand.u32 2147483647, %v983
      %vm1018 = vcmp.lt.f32.partialorder %v1017, 0.0004427343
      %v1019 = vsel %vm1018, %v1016, %v1013
      %v1020 = vsel %vm968, %v960, %v992
      %v1021 = vsel %vm969, %v962, %v1001
      %v1022 = vsel %vm970, %v964, %v1010
      %v1023 = vsel %vm971, %v966, %v1019
      %1024 = vst [vmem:[%s316] sm:$0xff] %v1020
      %1025 = vst [vmem:[%s316 + $0x8] sm:$0xff] %v1021
      %1026 = vst [vmem:[%s316 + $0x10] sm:$0xff] %v1022
      %1027 = vst [vmem:[%s316 + $0x18] sm:$0xff] %v1023
      %s1028 = smul.u32 2, %s23
      %p1029 = scmp.lt.s32.totalorder %s22, 1
      %s1030 = scalar_select %p1029, %s22, 1
      %p1031 = scmp.lt.s32.totalorder %s1028, 1
      %s1032 = scalar_select %p1031, %s1028, 1
      %s1033 = smul.addr %s1030, 4
      %s1034 = sadd.s32 %s1032, %s1033
      %s1035 = smul.addr %s1034, 8
      %s1036 = scalar_lea.vmem %s7, %s1035
      // Predicated region
      $region49: #{hypernet_forward.1} parent=47 // pred_check
        %p1037 = pneg %p204
      $region50: #{hypernet_forward.1} parent=47 // pred_check_branch
        %1039 = sbr.rel (%p1037) target = $region52
      $region51: #{hypernet_forward.1} parent=47 // pred_region
        %s1040 = smul.u32 2, %s23
      $region52: #{hypernet_forward.1} parent=47 // pred_fallthru
        _
    $region48: #{hypernet_forward.1} parent=5 // pred_fallthru
      _
    %p1041 = scmp.le.s32.totalorder 2, %s13
    // Predicated region
    $region53: #{hypernet_forward.1} parent=5 // pred_check
      %p1042 = pneg %p1041
    $region54: #{hypernet_forward.1} parent=5 // pred_check_branch
      %1044 = sbr.rel (%p1042) target = $region56
    $region55: #{hypernet_forward.1} parent=5 // pred_region
      %s1045 = ssub.s32 %s13, 2
      // Predicated region
      $region57: #{hypernet_forward.1} parent=55 // pred_check
        %p1046 = pneg %p210
      $region58: #{hypernet_forward.1} parent=55 // pred_check_branch
        %1048 = sbr.rel (%p1046) target = $region60
      $region59: #{hypernet_forward.1} parent=55 // pred_region
        %s1049 = smul.u32 2, %s25
        %p1050 = scmp.lt.s32.totalorder %s24, 1
        %s1051 = scalar_select %p1050, %s24, 1
        %p1052 = scmp.lt.s32.totalorder %s1049, 1
        %s1053 = scalar_select %p1052, %s1049, 1
        %s1054 = smul.addr %s1051, 4
        %s1055 = sadd.s32 %s1053, %s1054
        %s1056 = smul.addr %s1055, 8
        %s1057 = scalar_lea.vmem %s7, %s1056
      $region60: #{hypernet_forward.1} parent=55 // pred_fallthru
        _
    $region56: #{hypernet_forward.1} parent=5 // pred_fallthru
      _
  $region6: #{hypernet_forward.1} parent=0 // loop_footer
    %s17 = sadd.s32 1, %s13
  $region7: #{hypernet_forward.1} parent=0 // loop_footer_branch
    %12 = sbr.rel target = $region3
  $region8: #{hypernet_forward.1} parent=0 // loop_exit
    _

</llo_original>
